<compile_context>
chip_gen: v7x
topology: tpu7x:2x2x1
jax: 0.10.0
libtpu: 0.0.40
codegen_flags: <defaults>
</compile_context>

<pallas_src>
import functools

import numpy as np
import jax
import jax.numpy as jnp
from jax import lax
from jax.experimental import pallas as pl
from jax.experimental.pallas import tpu as pltpu


def _round_up(x, m):
    return ((x + m - 1) // m) * m


def _lmf_partials_kernel(s, logits_ref, target_ref, m_ref, w_ref, out_ref):
    x = logits_ref[...].astype(jnp.float32)            # (TN, C)
    tgt = target_ref[...]                               # (TN, 1) int32 (-1 = pad row)
    m = m_ref[...].astype(jnp.float32)                  # (1, C) LDAM margins (>= 0)
    w = w_ref[...].astype(jnp.float32)                  # (1, C) CE class weights
    tn, c = x.shape

    col = lax.broadcasted_iota(jnp.int32, (tn, c), 1)
    is_tgt = col == tgt                                  # (TN, C); all-False for pad rows
    onehot = is_tgt.astype(jnp.float32)

    w_y = jnp.sum(onehot * w, axis=1, keepdims=True)     # weight[target]; 0 on pad rows
    m_y = jnp.sum(onehot * m, axis=1, keepdims=True)     # m_list[target]
    x_y = jnp.sum(onehot * x, axis=1, keepdims=True)     # logit at target

    # ---- shared shift: one row-max reused by both paths ----
    xmax = jnp.max(x, axis=1, keepdims=True)
    d = x - xmax                                         # <= 0

    # ---- FocalLoss path: weighted cross entropy on raw logits ----
    lse = jnp.log(jnp.sum(jnp.exp(d), axis=1, keepdims=True)) + xmax
    nll = lse - x_y                                      # -log_softmax(x)[y]

    # ---- LDAM path ----
    # z = s*x except z[target] = s*(x_y - m_y).  Because m_y >= 0 by
    # construction, z <= s*xmax, so s*xmax is a numerically valid shift and no
    # second row-max is needed.  The target column is masked out (not
    # subtracted) to avoid catastrophic cancellation when it dominates the row.
    e2 = jnp.exp(s * d)                                  # exp(s*x - s*xmax)
    dy = x_y - xmax                                      # <= 0
    sum_exp_z = (jnp.sum(jnp.where(is_tgt, 0.0, e2), axis=1, keepdims=True)
                 + jnp.exp(s * (dy - m_y)))
    lse_z = jnp.log(sum_exp_z) + s * xmax
    nll_z = lse_z - s * (x_y - m_y)                      # -log_softmax(z)[y]

    focal_p = jnp.sum(w_y * nll, keepdims=True)           # (1, 1)
    ldam_p = jnp.sum(w_y * nll_z, keepdims=True)          # (1, 1)
    w_p = jnp.sum(w_y, keepdims=True)                     # (1, 1)

    # Lane-dense (8, 128) partial-sum block: row 0, lanes 0/1/2 carry the sums.
    row = lax.broadcasted_iota(jnp.int32, out_ref.shape, 0)
    lane = lax.broadcasted_iota(jnp.int32, out_ref.shape, 1)
    partial = (jnp.where(lane == 0, focal_p, 0.0)
               + jnp.where(lane == 1, ldam_p, 0.0)
               + jnp.where(lane == 2, w_p, 0.0))
    out_ref[...] = jnp.where(row == 0, partial, 0.0)


def lmf_loss(logits, target, cls_num_list, weight,
             alpha=1.0, beta=1.0, gamma=2.0, max_m=0.5, s=30.0,
             tile_n=None):
    n, c = logits.shape
    itemsize = jnp.dtype(logits.dtype).itemsize

    # LDAM margin list (same math as the PyTorch __init__); margins are >= 0.
    m_list = 1.0 / np.sqrt(np.sqrt(np.asarray(cls_num_list, dtype=np.float64)))
    m_list = m_list * (max_m / np.max(m_list))
    m_arr = jnp.asarray(m_list, dtype=jnp.float32).reshape(1, c)
    w_arr = jnp.asarray(weight, dtype=jnp.float32).reshape(1, c)

    # Largest batch tile whose double-buffered logits block stays under ~16 MiB
    # (safe on v5e/v6e 128 MiB and v7x 64 MiB VMEM).
    if tile_n is None:
        per_buffer_budget = 8 * 1024 * 1024
        tile_n = max(8, (per_buffer_budget // max(1, c * itemsize)) // 8 * 8)
        tile_n = min(tile_n, 4096)
    tile_n = int(min(tile_n, _round_up(n, 8)))
    tile_n = _round_up(tile_n, 8)

    # Pad the batch to a multiple of the tile; padded rows get target = -1 so
    # their one-hot row is all-zero -> weight 0 -> zero contribution.
    n_pad = _round_up(n, tile_n)
    x = logits                                   # keep native dtype (no f32 pre-cast)
    tgt = target.astype(jnp.int32)
    if n_pad != n:
        x = jnp.pad(x, ((0, n_pad - n), (0, 0)))
        tgt = jnp.pad(tgt, (0, n_pad - n), constant_values=-1)
    tgt = tgt.reshape(n_pad, 1)

    num_tiles = n_pad // tile_n
    kernel = functools.partial(_lmf_partials_kernel, float(s))

    partials = pl.pallas_call(
        kernel,
        out_shape=jax.ShapeDtypeStruct((num_tiles * 8, 128), jnp.float32),
        grid=(num_tiles,),
        in_specs=[
            pl.BlockSpec((tile_n, c), lambda i: (i, 0)),   # logits tile
            pl.BlockSpec((tile_n, 1), lambda i: (i, 0)),   # target tile
            pl.BlockSpec((1, c), lambda i: (0, 0)),        # m_list (resident)
            pl.BlockSpec((1, c), lambda i: (0, 0)),        # class weights (resident)
        ],
        out_specs=pl.BlockSpec((8, 128), lambda i: (i, 0)),
        compiler_params=pltpu.CompilerParams(
            dimension_semantics=("parallel",),
            vmem_limit_bytes=32 * 1024 * 1024,
        ),
    )(x, tgt, m_arr, w_arr)

    sums = jnp.sum(partials, axis=0)             # (128,) tiny final reduction
    focal_sum, ldam_sum, w_sum = sums[0], sums[1], sums[2]

    # PyTorch weighted cross_entropy(reduction='mean') = sum(w_y*nll)/sum(w_y).
    logp = focal_sum / w_sum
    p = jnp.exp(-logp)
    focal_loss = (1.0 - p) ** gamma * logp       # torch.mean of a scalar is a no-op
    ldam_loss = ldam_sum / w_sum
    return alpha * focal_loss + beta * ldam_loss


def _lmf_loss_ref(logits, target, cls_num_list, weight,
                  alpha=1.0, beta=1.0, gamma=2.0, max_m=0.5, s=30.0):
    """Pure-JAX reference mirroring the PyTorch module."""
    logits = logits.astype(jnp.float32)
    n, c = logits.shape
    m_list = 1.0 / np.sqrt(np.sqrt(np.asarray(cls_num_list, dtype=np.float64)))
    m_list = m_list * (max_m / np.max(m_list))
    m_list = jnp.asarray(m_list, dtype=jnp.float32)
    weight = jnp.asarray(weight, dtype=jnp.float32)

    onehot = jax.nn.one_hot(target, c, dtype=jnp.float32)
    w_y = weight[target]

    # focal path
    nll = -jnp.sum(jax.nn.log_softmax(logits, axis=1) * onehot, axis=1)
    logp = jnp.sum(w_y * nll) / jnp.sum(w_y)
    p = jnp.exp(-logp)
    focal = (1.0 - p) ** gamma * logp

    # ldam path
    batch_m = m_list[target][:, None]
    z = s * jnp.where(onehot.astype(bool), logits - batch_m, logits)
    nll_z = -jnp.sum(jax.nn.log_softmax(z, axis=1) * onehot, axis=1)
    ldam = jnp.sum(w_y * nll_z) / jnp.sum(w_y)
    return alpha * focal + beta * ldam


if __name__ == "__main__":
    key = jax.random.PRNGKey(0)
    k_logits, k_target, k_logits2, k_target2 = jax.random.split(key, 4)

    C = 4                                        # num_classes
    cls_num_list = [100.0, 60.0, 25.0, 8.0]      # synthetic class counts
    weight = [1.0, 1.5, 2.0, 3.0]                # synthetic per-class CE weights

    # --- case 1: small batch, single tile ---
    N1 = 8
    logits1 = jax.random.normal(k_logits, (N1, C), dtype=jnp.float32)
    target1 = jax.random.randint(k_target, (N1,), 0, C, dtype=jnp.int32)
    loss1 = jax.block_until_ready(
        lmf_loss(logits1, target1, cls_num_list, weight,
                 alpha=1.0, beta=1.0, gamma=2.0, max_m=0.5, s=30.0))
    ref1 = _lmf_loss_ref(logits1, target1, cls_num_list, weight,
                         alpha=1.0, beta=1.0, gamma=2.0, max_m=0.5, s=30.0)
    np.testing.assert_allclose(np.asarray(loss1), np.asarray(ref1),
                               rtol=1e-4, atol=1e-4)

    # --- case 2: exercises multi-tile grid + batch padding (N=20, tile=8) ---
    N2 = 20
    logits2 = jax.random.normal(k_logits2, (N2, C), dtype=jnp.float32)
    target2 = jax.random.randint(k_target2, (N2,), 0, C, dtype=jnp.int32)
    loss2 = jax.block_until_ready(
        lmf_loss(logits2, target2, cls_num_list, weight,
                 alpha=1.0, beta=1.0, gamma=2.0, max_m=0.5, s=30.0, tile_n=8))
    ref2 = _lmf_loss_ref(logits2, target2, cls_num_list, weight,
                         alpha=1.0, beta=1.0, gamma=2.0, max_m=0.5, s=30.0)
    np.testing.assert_allclose(np.asarray(loss2), np.asarray(ref2),
                               rtol=1e-4, atol=1e-4)

    print("KERNEL_OK")
</pallas_src>

<mosaic_0001>
module attributes {stable_mosaic.version = 11 : i64} {
  func.func @_lmf_partials_kernel(%arg0: i32, %arg1: memref<8x4xf32, #tpu.memory_space<vmem>>, %arg2: memref<8x1xi32, #tpu.memory_space<vmem>>, %arg3: memref<1x4xf32, #tpu.memory_space<vmem>>, %arg4: memref<1x4xf32, #tpu.memory_space<vmem>>, %arg5: memref<8x128xf32, #tpu.memory_space<vmem>>) attributes {dimension_semantics = [#tpu.dimension_semantics<parallel>], iteration_bounds = array<i64: 1>, scalar_prefetch = 0 : i64, scratch_operands = 0 : i64, tpu.core_type = #tpu.core_type<tc>, window_params = [{transform_indices = @transform_0, window_bounds = array<i64: 8, 4>}, {transform_indices = @transform_1, window_bounds = array<i64: 8, 1>}, {pipeline_mode = #tpu.pipeline_mode<synchronous>, transform_indices = @transform_2, window_bounds = array<i64: 1, 4>}, {pipeline_mode = #tpu.pipeline_mode<synchronous>, transform_indices = @transform_3, window_bounds = array<i64: 1, 4>}, {transform_indices = @transform_4, window_bounds = array<i64: 8, 128>}]} {
    %c0 = arith.constant 0 : index
    %c0_0 = arith.constant 0 : index
    %0 = vector.load %arg1[%c0, %c0_0] : memref<8x4xf32, #tpu.memory_space<vmem>>, vector<8x4xf32>
    %c0_1 = arith.constant 0 : index
    %c0_2 = arith.constant 0 : index
    %1 = vector.load %arg2[%c0_1, %c0_2] : memref<8x1xi32, #tpu.memory_space<vmem>>, vector<8x1xi32>
    %c0_3 = arith.constant 0 : index
    %c0_4 = arith.constant 0 : index
    %2 = vector.load %arg3[%c0_3, %c0_4] : memref<1x4xf32, #tpu.memory_space<vmem>>, vector<1x4xf32>
    %c0_5 = arith.constant 0 : index
    %c0_6 = arith.constant 0 : index
    %3 = vector.load %arg4[%c0_5, %c0_6] : memref<1x4xf32, #tpu.memory_space<vmem>>, vector<1x4xf32>
    %4 = tpu.iota {dimensions = array<i32: 1>} : vector<8x4xi32>
    %5 = vector.broadcast %1 : vector<8x1xi32> to vector<8x4xi32>
    %6 = arith.cmpi eq, %4, %5 : vector<8x4xi32>
    %7 = arith.extui %6 : vector<8x4xi1> to vector<8x4xi32>
    %8 = arith.sitofp %7 : vector<8x4xi32> to vector<8x4xf32>
    %9 = vector.broadcast %3 : vector<1x4xf32> to vector<8x4xf32>
    %10 = arith.mulf %8, %9 : vector<8x4xf32>
    %cst = arith.constant dense<0.000000e+00> : vector<8xf32>
    %11 = vector.multi_reduction <add>, %10, %cst [1] : vector<8x4xf32> to vector<8xf32>
    %12 = vector.shape_cast %11 : vector<8xf32> to vector<8x1xf32>
    %13 = vector.broadcast %2 : vector<1x4xf32> to vector<8x4xf32>
    %14 = arith.mulf %8, %13 : vector<8x4xf32>
    %cst_7 = arith.constant dense<0.000000e+00> : vector<8xf32>
    %15 = vector.multi_reduction <add>, %14, %cst_7 [1] : vector<8x4xf32> to vector<8xf32>
    %16 = vector.shape_cast %15 : vector<8xf32> to vector<8x1xf32>
    %17 = arith.mulf %8, %0 : vector<8x4xf32>
    %cst_8 = arith.constant dense<0.000000e+00> : vector<8xf32>
    %18 = vector.multi_reduction <add>, %17, %cst_8 [1] : vector<8x4xf32> to vector<8xf32>
    %19 = vector.shape_cast %18 : vector<8xf32> to vector<8x1xf32>
    %cst_9 = arith.constant dense<0xFF800000> : vector<8xf32>
    %20 = vector.multi_reduction <maximumf>, %0, %cst_9 [1] : vector<8x4xf32> to vector<8xf32>
    %21 = vector.shape_cast %20 : vector<8xf32> to vector<8x1xf32>
    %22 = vector.broadcast %21 : vector<8x1xf32> to vector<8x4xf32>
    %23 = arith.subf %0, %22 : vector<8x4xf32>
    %24 = math.exp %23 : vector<8x4xf32>
    %cst_10 = arith.constant dense<0.000000e+00> : vector<8xf32>
    %25 = vector.multi_reduction <add>, %24, %cst_10 [1] : vector<8x4xf32> to vector<8xf32>
    %26 = vector.shape_cast %25 : vector<8xf32> to vector<8x1xf32>
    %27 = math.log %26 : vector<8x1xf32>
    %28 = arith.addf %27, %21 : vector<8x1xf32>
    %29 = arith.subf %28, %19 : vector<8x1xf32>
    %cst_11 = arith.constant 3.000000e+01 : f32
    %30 = vector.broadcast %cst_11 : f32 to vector<8x4xf32>
    %31 = arith.mulf %30, %23 : vector<8x4xf32>
    %32 = math.exp %31 : vector<8x4xf32>
    %33 = arith.subf %19, %21 : vector<8x1xf32>
    %cst_12 = arith.constant 0.000000e+00 : f32
    %34 = vector.broadcast %cst_12 : f32 to vector<8x4xf32>
    %35 = arith.select %6, %34, %32 : vector<8x4xi1>, vector<8x4xf32>
    %cst_13 = arith.constant dense<0.000000e+00> : vector<8xf32>
    %36 = vector.multi_reduction <add>, %35, %cst_13 [1] : vector<8x4xf32> to vector<8xf32>
    %37 = vector.shape_cast %36 : vector<8xf32> to vector<8x1xf32>
    %38 = arith.subf %33, %16 : vector<8x1xf32>
    %cst_14 = arith.constant 3.000000e+01 : f32
    %39 = vector.broadcast %cst_14 : f32 to vector<8x1xf32>
    %40 = arith.mulf %39, %38 : vector<8x1xf32>
    %41 = math.exp %40 : vector<8x1xf32>
    %42 = arith.addf %37, %41 : vector<8x1xf32>
    %43 = math.log %42 : vector<8x1xf32>
    %cst_15 = arith.constant 3.000000e+01 : f32
    %44 = vector.broadcast %cst_15 : f32 to vector<8x1xf32>
    %45 = arith.mulf %44, %21 : vector<8x1xf32>
    %46 = arith.addf %43, %45 : vector<8x1xf32>
    %47 = arith.subf %19, %16 : vector<8x1xf32>
    %cst_16 = arith.constant 3.000000e+01 : f32
    %48 = vector.broadcast %cst_16 : f32 to vector<8x1xf32>
    %49 = arith.mulf %48, %47 : vector<8x1xf32>
    %50 = arith.subf %46, %49 : vector<8x1xf32>
    %51 = arith.mulf %12, %29 : vector<8x1xf32>
    %52 = vector.shape_cast %51 : vector<8x1xf32> to vector<1x8x1xf32>
    %cst_17 = arith.constant dense<0.000000e+00> : vector<1xf32>
    %53 = vector.multi_reduction <add>, %52, %cst_17 [1, 2] : vector<1x8x1xf32> to vector<1xf32>
    %54 = vector.shape_cast %53 : vector<1xf32> to vector<1x1x1xf32>
    %55 = vector.extract %54[0, 0, 0] : f32 from vector<1x1x1xf32>
    %56 = vector.broadcast %55 : f32 to vector<1x1xf32>
    %57 = arith.mulf %12, %50 : vector<8x1xf32>
    %58 = vector.shape_cast %57 : vector<8x1xf32> to vector<1x8x1xf32>
    %cst_18 = arith.constant dense<0.000000e+00> : vector<1xf32>
    %59 = vector.multi_reduction <add>, %58, %cst_18 [1, 2] : vector<1x8x1xf32> to vector<1xf32>
    %60 = vector.shape_cast %59 : vector<1xf32> to vector<1x1x1xf32>
    %61 = vector.extract %60[0, 0, 0] : f32 from vector<1x1x1xf32>
    %62 = vector.broadcast %61 : f32 to vector<1x1xf32>
    %63 = vector.shape_cast %12 : vector<8x1xf32> to vector<1x8x1xf32>
    %cst_19 = arith.constant dense<0.000000e+00> : vector<1xf32>
    %64 = vector.multi_reduction <add>, %63, %cst_19 [1, 2] : vector<1x8x1xf32> to vector<1xf32>
    %65 = vector.shape_cast %64 : vector<1xf32> to vector<1x1x1xf32>
    %66 = vector.extract %65[0, 0, 0] : f32 from vector<1x1x1xf32>
    %67 = vector.broadcast %66 : f32 to vector<1x1xf32>
    %68 = tpu.iota {dimensions = array<i32: 0>} : vector<8x128xi32>
    %69 = tpu.iota {dimensions = array<i32: 1>} : vector<8x128xi32>
    %c0_i32 = arith.constant 0 : i32
    %70 = vector.broadcast %c0_i32 : i32 to vector<8x128xi32>
    %71 = arith.cmpi eq, %69, %70 : vector<8x128xi32>
    %cst_20 = arith.constant 0.000000e+00 : f32
    %72 = vector.shape_cast %56 : vector<1x1xf32> to vector<1x1xf32>
    %73 = vector.broadcast %72 : vector<1x1xf32> to vector<8x128xf32>
    %74 = vector.broadcast %cst_20 : f32 to vector<8x128xf32>
    %75 = arith.select %71, %73, %74 : vector<8x128xi1>, vector<8x128xf32>
    %c1_i32 = arith.constant 1 : i32
    %76 = vector.broadcast %c1_i32 : i32 to vector<8x128xi32>
    %77 = arith.cmpi eq, %69, %76 : vector<8x128xi32>
    %cst_21 = arith.constant 0.000000e+00 : f32
    %78 = vector.shape_cast %62 : vector<1x1xf32> to vector<1x1xf32>
    %79 = vector.broadcast %78 : vector<1x1xf32> to vector<8x128xf32>
    %80 = vector.broadcast %cst_21 : f32 to vector<8x128xf32>
    %81 = arith.select %77, %79, %80 : vector<8x128xi1>, vector<8x128xf32>
    %82 = arith.addf %75, %81 : vector<8x128xf32>
    %c2_i32 = arith.constant 2 : i32
    %83 = vector.broadcast %c2_i32 : i32 to vector<8x128xi32>
    %84 = arith.cmpi eq, %69, %83 : vector<8x128xi32>
    %cst_22 = arith.constant 0.000000e+00 : f32
    %85 = vector.shape_cast %67 : vector<1x1xf32> to vector<1x1xf32>
    %86 = vector.broadcast %85 : vector<1x1xf32> to vector<8x128xf32>
    %87 = vector.broadcast %cst_22 : f32 to vector<8x128xf32>
    %88 = arith.select %84, %86, %87 : vector<8x128xi1>, vector<8x128xf32>
    %89 = arith.addf %82, %88 : vector<8x128xf32>
    %c0_i32_23 = arith.constant 0 : i32
    %90 = vector.broadcast %c0_i32_23 : i32 to vector<8x128xi32>
    %91 = arith.cmpi eq, %68, %90 : vector<8x128xi32>
    %cst_24 = arith.constant 0.000000e+00 : f32
    %92 = vector.broadcast %cst_24 : f32 to vector<8x128xf32>
    %93 = arith.select %91, %89, %92 : vector<8x128xi1>, vector<8x128xf32>
    %c0_25 = arith.constant 0 : index
    %c0_26 = arith.constant 0 : index
    %94 = vector.load %arg5[%c0_25, %c0_26] : memref<8x128xf32, #tpu.memory_space<vmem>>, vector<8x128xf32>
    tpu.vector_store %arg5[%c0_25, %c0_26], %93 {strides = array<i32>} : memref<8x128xf32, #tpu.memory_space<vmem>>, vector<8x128xf32>,
    return
  }
  func.func @transform_0(%arg0: i32) -> (i32, i32) {
    %c0_i32 = arith.constant 0 : i32
    %c0_i32_0 = arith.constant 0 : i32
    return %arg0, %c0_i32 : i32, i32
  }
  func.func @transform_1(%arg0: i32) -> (i32, i32) {
    %c0_i32 = arith.constant 0 : i32
    %c0_i32_0 = arith.constant 0 : i32
    return %arg0, %c0_i32 : i32, i32
  }
  func.func @transform_2(%arg0: i32) -> (i32, i32) {
    %c0_i32 = arith.constant 0 : i32
    %c0_i32_0 = arith.constant 0 : i32
    %c0_i32_1 = arith.constant 0 : i32
    return %c0_i32, %c0_i32_0 : i32, i32
  }
  func.func @transform_3(%arg0: i32) -> (i32, i32) {
    %c0_i32 = arith.constant 0 : i32
    %c0_i32_0 = arith.constant 0 : i32
    %c0_i32_1 = arith.constant 0 : i32
    return %c0_i32, %c0_i32_0 : i32, i32
  }
  func.func @transform_4(%arg0: i32) -> (i32, i32) {
    %c0_i32 = arith.constant 0 : i32
    %c0_i32_0 = arith.constant 0 : i32
    return %arg0, %c0_i32 : i32, i32
  }
}

</mosaic_0001>

<llo_original>
// kernel: tpu_custom_call.1
$region0: #{tpu_custom_call.1}
  #allocation0 [shape = 'u32[]', space=smem, size = 0x4, offset = 0x4, fixed_abs, tag = 'smem constant byte address 0x4 - core index']
  #allocation1 [shape = 'u32[144,128]{1,0:T(1,128)}', space=vmem, size = 0x12000, scoped, tag = 'internal scratch']
  %s0 = inlined_call_operand.vmem [shape: f32[8,4], index: 0, kind: input, shape index: {}]
  %s1 = inlined_call_operand.vmem [shape: s32[8,1], index: 1, kind: input, shape index: {}]
  %s2 = inlined_call_operand.vmem [shape: f32[1,4], index: 2, kind: input, shape index: {}]
  %s3 = inlined_call_operand.vmem [shape: f32[1,4], index: 3, kind: input, shape index: {}]
  %s4 = inlined_call_operand.hbm [shape: f32[8,128], index: 4, kind: output, shape index: {}]
  %s5 = sld [smem:[#allocation0]]
  $region26: #{tpu_custom_call.1} parent=0
    _
  %s7 = ssub.s32 1, %s5
  %s8 = scalar_select 0, %s7, %s5
  $region1: #{tpu_custom_call.1} parent=0
    #allocation2 [shape = 'u8[4096]{0}', space=vmem, size = 0x1000, scoped, tag = 'output window, operand 0, single buffered']
    #allocation3 [shape = 's32[1]{0}', space=sflag, size = 0x4, scoped, tag = 'scoped memory for tpu_custom_call.1']
    %9 = vsyncpa [#allocation3], 0
    // Predicated region
    $region2: #{tpu_custom_call.1} parent=1 // pred_check
      _
    $region3: #{tpu_custom_call.1} parent=1 // pred_check_branch
      %11 = sbr.rel (0) target = $region5
    $region4: #{tpu_custom_call.1} parent=1 // pred_region
      _
    $region5: #{tpu_custom_call.1} parent=1 // pred_fallthru
      _
    // Predicated region
    $region6: #{tpu_custom_call.1} parent=1 // pred_check
      _
    $region7: #{tpu_custom_call.1} parent=1 // pred_check_branch
      %13 = sbr.rel (0) target = $region9
    $region8: #{tpu_custom_call.1} parent=1 // pred_region
      _
    $region9: #{tpu_custom_call.1} parent=1 // pred_fallthru
      _
    // Predicated region
    $region10: #{tpu_custom_call.1} parent=1 // pred_check
      _
    $region11: #{tpu_custom_call.1} parent=1 // pred_check_branch
      %15 = sbr.rel (0) target = $region13
    $region12: #{tpu_custom_call.1} parent=1 // pred_region
      _
    $region13: #{tpu_custom_call.1} parent=1 // pred_fallthru
      _
    // Predicated region
    $region14: #{tpu_custom_call.1} parent=1 // pred_check
      _
    $region15: #{tpu_custom_call.1} parent=1 // pred_check_branch
      %17 = sbr.rel (0) target = $region17
    $region16: #{tpu_custom_call.1} parent=1 // pred_region
      _
    $region17: #{tpu_custom_call.1} parent=1 // pred_fallthru
      _
    %v18 = vld [vmem:[%s0] sm:$0xff]
    %v19 = vld [vmem:[%s1] sm:$0xff]
    %v20 = vld [vmem:[%s2] sm:$0x1]
    %v21 = vld [vmem:[%s3] sm:$0x1]
    %v22 = vlaneseq
    %v23 = vand.u32 %v22, 127
    %24 = vset.pattern.permute.xlu0 0
    %25 = vperm.xlu0 %24, %v19
    %v26 = vpop.permute.xlu0 %25
    %vm27 = vcmp.eq.s32.totalorder %v23, %v26
    %v28 = vsel %vm27, 1, 0
    %v29 = vcvt.s32.f32 %v28
    %v31 = vlaneseq
    %v32 = vshrl.u32 %v31, 7
    %v33 = vsub.s32 0, %v32
    %v34 = vrot.slane %v21, %v33
    %v36 = vmul.f32 %v29, %v34
    %vm37 = vcmask 31744
    %v38 = vsel %vm37, %v36, 0.0
    %39 = vadd.xlane.f32.xlu0 %v38
    %v40 = vpop.xlane.xlu0 %39
    %v42 = vlaneseq
    %v43 = vshrl.u32 %v42, 7
    %v44 = vsub.s32 0, %v43
    %v45 = vrot.slane %v20, %v44
    %v47 = vmul.f32 %v29, %v45
    %v48 = vsel %vm37, %v47, 0.0
    %49 = vadd.xlane.f32.xlu0 %v48
    %v50 = vpop.xlane.xlu0 %49
    %v51 = vmul.f32 %v29, %v18
    %v52 = vsel %vm37, %v51, 0.0
    %53 = vadd.xlane.f32.xlu0 %v52
    %v54 = vpop.xlane.xlu0 %53
    %v55 = vsel %vm37, %v18, -inf
    %56 = vmax.xlane.f32.xlu0 %v55
    %v57 = vpop.xlane.xlu0 %56
    %v58 = vsub.f32 %v18, %v57
    %v59 = vmul.f32 %v58, 1.442695
    %v60 = vpow.pop %v59
    %v61 = vsel %vm37, %v60, 0.0
    %62 = vadd.xlane.f32.xlu0 %v61
    %v63 = vpop.xlane.xlu0 %62
    %v64 = vlog2.pop %v63
    %v65 = vmul.f32 %v64, 0.6931472
    %v66 = vadd.f32 %v65, %v57
    %v67 = vsub.f32 %v66, %v54
    %v68 = vmul.f32 %v58, 30.0
    %v69 = vmul.f32 %v68, 1.442695
    %v70 = vpow.pop %v69
    %v71 = vsub.f32 %v54, %v57
    %v72 = vsel %vm27, 0.0, %v70
    %v73 = vsel %vm37, %v72, 0.0
    %74 = vadd.xlane.f32.xlu0 %v73
    %v75 = vpop.xlane.xlu0 %74
    %v76 = vsub.f32 %v71, %v50
    %v77 = vmul.f32 %v76, 30.0
    %v78 = vmul.f32 %v77, 1.442695
    %v79 = vpow.pop %v78
    %v80 = vadd.f32 %v75, %v79
    %v81 = vlog2.pop %v80
    %v82 = vmul.f32 %v81, 0.6931472
    %v83 = vmul.f32 %v57, 30.0
    %v84 = vadd.f32 %v82, %v83
    %v85 = vsub.f32 %v54, %v50
    %v86 = vmul.f32 %v85, 30.0
    %v87 = vsub.f32 %v84, %v86
    %v88 = vmul.f32 %v40, %v67
    %vm89 = vcmask 7168
    %v90 = vsel %vm89, %v88, 0.0
    %91 = vadd.xlane.f32.xlu0 %v90
    %v92 = vpop.xlane.xlu0 %91
    %v93 = vrot.slane %v92, 4
    %v94 = vadd.f32 %v92, %v93
    %v95 = vrot.slane %v94, 2
    %v96 = vadd.f32 %v94, %v95
    %v97 = vrot.slane %v96, 1
    %v98 = vadd.f32 %v96, %v97
    %s99 = vtos %v98
    %v100 = vmul.f32 %v40, %v87
    %v101 = vsel %vm89, %v100, 0.0
    %102 = vadd.xlane.f32.xlu0 %v101
    %v103 = vpop.xlane.xlu0 %102
    %v104 = vrot.slane %v103, 4
    %v105 = vadd.f32 %v103, %v104
    %v106 = vrot.slane %v105, 2
    %v107 = vadd.f32 %v105, %v106
    %v108 = vrot.slane %v107, 1
    %v109 = vadd.f32 %v107, %v108
    %s110 = vtos %v109
    %v111 = vsel %vm89, %v40, 0.0
    %112 = vadd.xlane.f32.xlu0 %v111
    %v113 = vpop.xlane.xlu0 %112
    %v114 = vrot.slane %v113, 4
    %v115 = vadd.f32 %v113, %v114
    %v116 = vrot.slane %v115, 2
    %v117 = vadd.f32 %v115, %v116
    %v118 = vrot.slane %v117, 1
    %v119 = vadd.f32 %v117, %v118
    %s120 = vtos %v119
    %v121 = vlaneseq
    %v122 = vshrl.u32 %v121, 7
    %vm123 = vcmp.eq.s32.totalorder %v23, 0
    %v124 = vstv %s99
    %v125 = vsel %vm123, %v124, 0.0
    %vm126 = vcmp.eq.s32.totalorder %v23, 1
    %v127 = vstv %s110
    %v128 = vsel %vm126, %v127, 0.0
    %v129 = vadd.f32 %v125, %v128
    %vm130 = vcmp.eq.s32.totalorder %v23, 2
    %v131 = vstv %s120
    %v132 = vsel %vm130, %v131, 0.0
    %v133 = vadd.f32 %v129, %v132
    %vm134 = vcmp.eq.s32.totalorder %v122, 0
    %v135 = vsel %vm134, %v133, 0.0
    %136 = vst [vmem:[#allocation2] sm:$0xff] %v135
    // Predicated region
    $region18: #{tpu_custom_call.1} parent=1 // pred_check
      _
    $region19: #{tpu_custom_call.1} parent=1 // pred_check_branch
      %138 = sbr.rel (0) target = $region21
    $region20: #{tpu_custom_call.1} parent=1 // pred_region
      %s140 = ssub.s32 128, 128
      %141 = vsyncadd [#allocation3], %s140
      %s143 = sshll.u32 [#allocation2], 4
      %s144 = int_to_ptr.vmem [resolvable:$true] %s143
      %146 = dma.vmem_to_hbm [thread:$0]  %s144, 128, %s4, [#allocation3]
    $region21: #{tpu_custom_call.1} parent=1 // pred_fallthru
      _
    // Predicated region
    $region22: #{tpu_custom_call.1} parent=1 // pred_check
      _
    $region23: #{tpu_custom_call.1} parent=1 // pred_check_branch
      %148 = sbr.rel (0) target = $region25
    $region24: #{tpu_custom_call.1} parent=1 // pred_region
      %149 = dma.done [#allocation3], 128
    $region25: #{tpu_custom_call.1} parent=1 // pred_fallthru
      _
    %150 = vsyncpa [#allocation3], 1

</llo_original>
